<compile_context>
chip_gen: v6e
topology: v6e:2x2x1
jax: 0.10.0
libtpu: 0.0.40
codegen_flags: <defaults>
</compile_context>

<pallas_src>
import jax
import jax.numpy as jnp
from jax.experimental import pallas as pl
from jax.experimental.pallas import tpu as pltpu

C_IN = 256
C_HID = 128
BN_EPS = 1e-5


def _tolerance_kernel(x_ref, w1_ref, c1_ref, w2_ref, c2_ref, w3_ref, b3_ref, o_ref):
    # x_ref: (256, TN) bf16 tile of the collapsed (channels, B*N) slab.
    x = x_ref[...]

    # conv1 + bn1 folded: relu(W1' @ x + c1)   (MXU, bf16 in / f32 acc)
    h1 = jnp.dot(w1_ref[...], x, preferred_element_type=jnp.float32)   # (128, TN)
    h1 = jnp.maximum(h1 + c1_ref[...], 0.0).astype(jnp.bfloat16)

    # conv2 + bn2 folded: relu(W2' @ h1 + c2)
    h2 = jnp.dot(w2_ref[...], h1, preferred_element_type=jnp.float32)  # (128, TN)
    h2 = jnp.maximum(h2 + c2_ref[...], 0.0)

    # conv3 (128 -> 1): off the MXU — VPU multiply + sublane reduce (XLU).
    h3 = jnp.sum(w3_ref[...] * h2, axis=0, keepdims=True)              # (1, TN)

    o_ref[...] = (h3 + b3_ref[0]).astype(o_ref.dtype)


def tolerance_net_forward(vp_features, params):
    """vp_features: (B, 256, num_seed, num_depth) f32 -> (B, num_seed, num_depth) f32."""
    B, C, num_seed, num_depth = vp_features.shape
    assert C == C_IN
    N = num_seed * num_depth
    M = B * N

    (w1, b1, g1, beta1, m1, v1,
     w2, b2, g2, beta2, m2, v2,
     w3, b3) = params

    # Fold conv bias + BatchNorm (inference) into weights / per-channel shift.
    s1 = g1 / jnp.sqrt(v1 + BN_EPS)
    w1f = (w1 * s1[:, None]).astype(jnp.bfloat16)                 # (128, 256)
    c1 = (s1 * (b1 - m1) + beta1).reshape(C_HID, 1)               # (128, 1) f32
    s2 = g2 / jnp.sqrt(v2 + BN_EPS)
    w2f = (w2 * s2[:, None]).astype(jnp.bfloat16)                 # (128, 128)
    c2 = (s2 * (b2 - m2) + beta2).reshape(C_HID, 1)               # (128, 1) f32
    w3c = w3.reshape(C_HID, 1).astype(jnp.float32)                # (128, 1) column
    b3s = b3.reshape(1).astype(jnp.float32)                       # SMEM scalar

    # Collapse batch + spatial into a single lane axis: (256, B*N), bf16 for MXU.
    x = jnp.transpose(vp_features.reshape(B, C_IN, N), (1, 0, 2)).reshape(C_IN, M)
    x = x.astype(jnp.bfloat16)

    # Tile the lane axis; pad to a lane-aligned multiple of the tile size.
    m128 = pl.cdiv(M, 128) * 128
    TN = min(1024, m128)                      # multiple of 128, bounded working set
    M_pad = pl.cdiv(M, TN) * TN
    if M_pad != M:
        x = jnp.pad(x, ((0, 0), (0, M_pad - M)))
    num_tiles = M_pad // TN

    out = pl.pallas_call(
        _tolerance_kernel,
        out_shape=jax.ShapeDtypeStruct((1, M_pad), jnp.float32),
        grid_spec=pltpu.PrefetchScalarGridSpec(
            num_scalar_prefetch=0,
            grid=(num_tiles,),
            in_specs=[
                pl.BlockSpec((C_IN, TN), lambda n: (0, n)),          # x tile (bf16)
                pl.BlockSpec((C_HID, C_IN), lambda n: (0, 0)),       # W1' (bf16)
                pl.BlockSpec((C_HID, 1), lambda n: (0, 0)),          # c1
                pl.BlockSpec((C_HID, C_HID), lambda n: (0, 0)),      # W2' (bf16)
                pl.BlockSpec((C_HID, 1), lambda n: (0, 0)),          # c2
                pl.BlockSpec((C_HID, 1), lambda n: (0, 0)),          # w3 column
                pl.BlockSpec(memory_space=pltpu.MemorySpace.SMEM),   # b3 scalar
            ],
            out_specs=pl.BlockSpec((1, TN), lambda n: (0, n)),
        ),
        compiler_params=pltpu.CompilerParams(
            dimension_semantics=("parallel",)),
    )(x, w1f, c1, w2f, c2, w3c, b3s)

    out = out[0, :M].reshape(B, N).reshape(B, num_seed, num_depth)
    return out


def init_params(key):
    ks = jax.random.split(key, 8)
    w1 = jax.random.normal(ks[0], (C_HID, C_IN), jnp.float32) * 0.05
    b1 = jax.random.normal(ks[1], (C_HID,), jnp.float32) * 0.05
    w2 = jax.random.normal(ks[2], (C_HID, C_HID), jnp.float32) * 0.05
    b2 = jax.random.normal(ks[3], (C_HID,), jnp.float32) * 0.05
    w3 = jax.random.normal(ks[4], (1, C_HID), jnp.float32) * 0.05
    b3 = jax.random.normal(ks[5], (1,), jnp.float32) * 0.05
    # BatchNorm params (inference running stats), deterministic but non-trivial.
    g1 = 1.0 + 0.1 * jax.random.normal(ks[6], (C_HID,), jnp.float32)
    beta1 = 0.05 * jax.random.normal(ks[7], (C_HID,), jnp.float32)
    m1 = jnp.linspace(-0.1, 0.1, C_HID, dtype=jnp.float32)
    v1 = jnp.ones((C_HID,), jnp.float32) * 0.9
    g2 = jnp.ones((C_HID,), jnp.float32) * 1.1
    beta2 = jnp.full((C_HID,), 0.02, jnp.float32)
    m2 = jnp.linspace(0.0, 0.05, C_HID, dtype=jnp.float32)
    v2 = jnp.ones((C_HID,), jnp.float32) * 1.2
    return (w1, b1, g1, beta1, m1, v1,
            w2, b2, g2, beta2, m2, v2,
            w3, b3)


def reference_forward(vp_features, params):
    """Pure-JAX f32 reference mirroring the PyTorch forward (BN in eval mode)."""
    (w1, b1, g1, beta1, m1, v1,
     w2, b2, g2, beta2, m2, v2,
     w3, b3) = params
    B, C, S, D = vp_features.shape
    x = vp_features.reshape(B, C, S * D)

    def bn(x, g, beta, m, v):
        return (x - m[None, :, None]) / jnp.sqrt(v[None, :, None] + BN_EPS) \
            * g[None, :, None] + beta[None, :, None]

    h = jnp.einsum('oc,bcn->bon', w1, x) + b1[None, :, None]
    h = jax.nn.relu(bn(h, g1, beta1, m1, v1))
    h = jnp.einsum('oc,bcn->bon', w2, h) + b2[None, :, None]
    h = jax.nn.relu(bn(h, g2, beta2, m2, v2))
    h = jnp.einsum('oc,bcn->bon', w3, h) + b3[None, :, None]
    return h.reshape(B, S, D)


if __name__ == "__main__":
    key = jax.random.PRNGKey(0)
    pkey, xkey = jax.random.split(key)
    params = init_params(pkey)

    B, num_seed, num_depth = 2, 32, 4   # N = 128 -> lane-aligned, M = B*N = 256
    vp_features = jax.random.normal(xkey, (B, C_IN, num_seed, num_depth), jnp.float32)

    out = tolerance_net_forward(vp_features, params)
    out = jax.block_until_ready(out)

    ref = reference_forward(vp_features, params)
    assert out.shape == (B, num_seed, num_depth)
    # bf16 MXU inputs (f32 accumulation) -> looser tolerance vs the f32 reference.
    assert jnp.allclose(out, ref, atol=5e-2, rtol=5e-2), \
        f"max err {jnp.max(jnp.abs(out - ref))}"

    print("KERNEL_OK")
</pallas_src>

<mosaic_0001>
module attributes {stable_mosaic.version = 11 : i64} {
  func.func @_tolerance_kernel(%arg0: i32, %arg1: memref<256x256xbf16, #tpu.memory_space<vmem>>, %arg2: memref<128x256xbf16, #tpu.memory_space<vmem>>, %arg3: memref<128x1xf32, #tpu.memory_space<vmem>>, %arg4: memref<128x128xbf16, #tpu.memory_space<vmem>>, %arg5: memref<128x1xf32, #tpu.memory_space<vmem>>, %arg6: memref<128x1xf32, #tpu.memory_space<vmem>>, %arg7: memref<1xf32, #tpu.memory_space<smem>>, %arg8: memref<1x256xf32, #tpu.memory_space<vmem>>) attributes {dimension_semantics = [#tpu.dimension_semantics<parallel>], iteration_bounds = array<i64: 1>, scalar_prefetch = 0 : i64, scratch_operands = 0 : i64, tpu.core_type = #tpu.core_type<tc>, window_params = [{transform_indices = @transform_0, window_bounds = array<i64: 256, 256>}, {pipeline_mode = #tpu.pipeline_mode<synchronous>, transform_indices = @transform_1, window_bounds = array<i64: 128, 256>}, {pipeline_mode = #tpu.pipeline_mode<synchronous>, transform_indices = @transform_2, window_bounds = array<i64: 128, 1>}, {pipeline_mode = #tpu.pipeline_mode<synchronous>, transform_indices = @transform_3, window_bounds = array<i64: 128, 128>}, {pipeline_mode = #tpu.pipeline_mode<synchronous>, transform_indices = @transform_4, window_bounds = array<i64: 128, 1>}, {pipeline_mode = #tpu.pipeline_mode<synchronous>, transform_indices = @transform_5, window_bounds = array<i64: 128, 1>}, {transform_indices = @transform_6, window_bounds = array<i64: 1>}, {transform_indices = @transform_7, window_bounds = array<i64: 1, 256>}]} {
    %c0 = arith.constant 0 : index
    %c0_0 = arith.constant 0 : index
    %0 = vector.load %arg1[%c0, %c0_0] : memref<256x256xbf16, #tpu.memory_space<vmem>>, vector<256x256xbf16>
    %c0_1 = arith.constant 0 : index
    %c0_2 = arith.constant 0 : index
    %1 = vector.load %arg2[%c0_1, %c0_2] : memref<128x256xbf16, #tpu.memory_space<vmem>>, vector<128x256xbf16>
    %cst = arith.constant dense<0.000000e+00> : vector<128x256xf32>
    %2 = tpu.matmul %1, %0, %cst {dimension_numbers = #tpu.dot_dimension_numbers<[1], [0], [0], [1], [0, 0, 1, 1], [], []>} : vector<128x256xbf16>, vector<256x256xbf16>, vector<128x256xf32> -> vector<128x256xf32>
    %c0_3 = arith.constant 0 : index
    %c0_4 = arith.constant 0 : index
    %3 = vector.load %arg3[%c0_3, %c0_4] : memref<128x1xf32, #tpu.memory_space<vmem>>, vector<128x1xf32>
    %4 = vector.broadcast %3 : vector<128x1xf32> to vector<128x256xf32>
    %5 = arith.addf %2, %4 : vector<128x256xf32>
    %cst_5 = arith.constant 0.000000e+00 : f32
    %6 = vector.broadcast %cst_5 : f32 to vector<128x256xf32>
    %7 = arith.maximumf %5, %6 : vector<128x256xf32>
    %8 = arith.truncf %7 : vector<128x256xf32> to vector<128x256xbf16>
    %c0_6 = arith.constant 0 : index
    %c0_7 = arith.constant 0 : index
    %9 = vector.load %arg4[%c0_6, %c0_7] : memref<128x128xbf16, #tpu.memory_space<vmem>>, vector<128x128xbf16>
    %cst_8 = arith.constant dense<0.000000e+00> : vector<128x256xf32>
    %10 = tpu.matmul %9, %8, %cst_8 {dimension_numbers = #tpu.dot_dimension_numbers<[1], [0], [0], [1], [0, 0, 1, 1], [], []>} : vector<128x128xbf16>, vector<128x256xbf16>, vector<128x256xf32> -> vector<128x256xf32>
    %c0_9 = arith.constant 0 : index
    %c0_10 = arith.constant 0 : index
    %11 = vector.load %arg5[%c0_9, %c0_10] : memref<128x1xf32, #tpu.memory_space<vmem>>, vector<128x1xf32>
    %12 = vector.broadcast %11 : vector<128x1xf32> to vector<128x256xf32>
    %13 = arith.addf %10, %12 : vector<128x256xf32>
    %cst_11 = arith.constant 0.000000e+00 : f32
    %14 = vector.broadcast %cst_11 : f32 to vector<128x256xf32>
    %15 = arith.maximumf %13, %14 : vector<128x256xf32>
    %c0_12 = arith.constant 0 : index
    %c0_13 = arith.constant 0 : index
    %16 = vector.load %arg6[%c0_12, %c0_13] : memref<128x1xf32, #tpu.memory_space<vmem>>, vector<128x1xf32>
    %17 = vector.broadcast %16 : vector<128x1xf32> to vector<128x256xf32>
    %18 = arith.mulf %17, %15 : vector<128x256xf32>
    %cst_14 = arith.constant dense<0.000000e+00> : vector<256xf32>
    %19 = vector.multi_reduction <add>, %18, %cst_14 [0] : vector<128x256xf32> to vector<256xf32>
    %20 = vector.shape_cast %19 : vector<256xf32> to vector<1x256xf32>
    %c0_15 = arith.constant 0 : index
    %21 = memref.load %arg7[%c0_15] : memref<1xf32, #tpu.memory_space<smem>>
    %22 = vector.broadcast %21 : f32 to vector<1x256xf32>
    %23 = arith.addf %20, %22 : vector<1x256xf32>
    %c0_16 = arith.constant 0 : index
    %c0_17 = arith.constant 0 : index
    %24 = vector.load %arg8[%c0_16, %c0_17] : memref<1x256xf32, #tpu.memory_space<vmem>>, vector<1x256xf32>
    tpu.vector_store %arg8[%c0_16, %c0_17], %23 {strides = array<i32>} : memref<1x256xf32, #tpu.memory_space<vmem>>, vector<1x256xf32>,
    return
  }
  func.func @transform_0(%arg0: i32) -> (i32, i32) {
    %c0_i32 = arith.constant 0 : i32
    %c0_i32_0 = arith.constant 0 : i32
    return %c0_i32, %arg0 : i32, i32
  }
  func.func @transform_1(%arg0: i32) -> (i32, i32) {
    %c0_i32 = arith.constant 0 : i32
    %c0_i32_0 = arith.constant 0 : i32
    %c0_i32_1 = arith.constant 0 : i32
    return %c0_i32, %c0_i32_0 : i32, i32
  }
  func.func @transform_2(%arg0: i32) -> (i32, i32) {
    %c0_i32 = arith.constant 0 : i32
    %c0_i32_0 = arith.constant 0 : i32
    %c0_i32_1 = arith.constant 0 : i32
    return %c0_i32, %c0_i32_0 : i32, i32
  }
  func.func @transform_3(%arg0: i32) -> (i32, i32) {
    %c0_i32 = arith.constant 0 : i32
    %c0_i32_0 = arith.constant 0 : i32
    %c0_i32_1 = arith.constant 0 : i32
    return %c0_i32, %c0_i32_0 : i32, i32
  }
  func.func @transform_4(%arg0: i32) -> (i32, i32) {
    %c0_i32 = arith.constant 0 : i32
    %c0_i32_0 = arith.constant 0 : i32
    %c0_i32_1 = arith.constant 0 : i32
    return %c0_i32, %c0_i32_0 : i32, i32
  }
  func.func @transform_5(%arg0: i32) -> (i32, i32) {
    %c0_i32 = arith.constant 0 : i32
    %c0_i32_0 = arith.constant 0 : i32
    %c0_i32_1 = arith.constant 0 : i32
    return %c0_i32, %c0_i32_0 : i32, i32
  }
  func.func @transform_6(%arg0: i32) -> i32 {
    %c0_i32 = arith.constant 0 : i32
    %c0_i32_0 = arith.constant 0 : i32
    return %c0_i32 : i32
  }
  func.func @transform_7(%arg0: i32) -> (i32, i32) {
    %c0_i32 = arith.constant 0 : i32
    %c0_i32_0 = arith.constant 0 : i32
    return %c0_i32, %arg0 : i32, i32
  }
}

</mosaic_0001>

<llo_original>
// kernel: tpu_custom_call.1
$region0: #{tpu_custom_call.1}
  #allocation0 [shape = 'u32[]', space=smem, size = 0x4, offset = 0x4, fixed_abs, tag = 'smem constant byte address 0x4 - core index']
  #allocation1 [shape = 'u32[144,128]{1,0:T(1,128)}', space=vmem, size = 0x12000, scoped, tag = 'internal scratch']
  #allocation2 [shape = 'f32[1]{0:T(128)S(6)}', space=smem, size = 0x200, scoped, tag = 'scoped memory for tpu_custom_call.1']
  %s0 = inlined_call_operand.vmem [shape: bf16[256,256], index: 0, kind: input, shape index: {}]
  %s1 = inlined_call_operand.vmem [shape: bf16[128,256], index: 1, kind: input, shape index: {}]
  %s2 = inlined_call_operand.vmem [shape: f32[128,1], index: 2, kind: input, shape index: {}]
  %s3 = inlined_call_operand.hbm [shape: bf16[128,128], index: 3, kind: input, shape index: {}]
  %s4 = inlined_call_operand.vmem [shape: f32[128,1], index: 4, kind: input, shape index: {}]
  %s5 = inlined_call_operand.vmem [shape: f32[128,1], index: 5, kind: input, shape index: {}]
  %s6 = inlined_call_operand.<no memory space> [shape: f32[1], index: 6, kind: input, shape index: {}]
  %s7 = inlined_call_operand.hbm [shape: f32[1,256], index: 7, kind: output, shape index: {}]
  %s8 = sld [smem:[#allocation0]]
  $region42: #{tpu_custom_call.1} parent=0
    _
  %s10 = ssub.s32 1, %s8
  %s11 = scalar_select 0, %s10, %s8
  %12 = sst [smem:[#allocation2]] %s6
  $region1: #{tpu_custom_call.1} parent=0
    #allocation3 [shape = 'u8[32768]{0}', space=vmem, size = 0x8000, scoped, tag = 'input window, operand 3, single buffered']
    #allocation4 [shape = 's32[1]{0}', space=sflag, size = 0x4, scoped, tag = 'scoped memory for tpu_custom_call.1']
    #allocation5 [shape = 's32[1]{0}', space=sflag, size = 0x4, scoped, tag = 'scoped memory for tpu_custom_call.1']
    #allocation6 [shape = 'u8[1024]{0}', space=vmem, size = 0x400, scoped, tag = 'output window, operand 0, single buffered']
    %13 = vsyncpa [#allocation4], 0
    %14 = vsyncpa [#allocation5], 0
    // Predicated region
    $region2: #{tpu_custom_call.1} parent=1 // pred_check
      _
    $region3: #{tpu_custom_call.1} parent=1 // pred_check_branch
      %16 = sbr.rel (0) target = $region5
    $region4: #{tpu_custom_call.1} parent=1 // pred_region
      _
    $region5: #{tpu_custom_call.1} parent=1 // pred_fallthru
      _
    // Predicated region
    $region6: #{tpu_custom_call.1} parent=1 // pred_check
      _
    $region7: #{tpu_custom_call.1} parent=1 // pred_check_branch
      %18 = sbr.rel (0) target = $region9
    $region8: #{tpu_custom_call.1} parent=1 // pred_region
      _
    $region9: #{tpu_custom_call.1} parent=1 // pred_fallthru
      _
    // Predicated region
    $region10: #{tpu_custom_call.1} parent=1 // pred_check
      _
    $region11: #{tpu_custom_call.1} parent=1 // pred_check_branch
      %20 = sbr.rel (0) target = $region13
    $region12: #{tpu_custom_call.1} parent=1 // pred_region
      _
    $region13: #{tpu_custom_call.1} parent=1 // pred_fallthru
      _
    // Predicated region
    $region14: #{tpu_custom_call.1} parent=1 // pred_check
      _
    $region15: #{tpu_custom_call.1} parent=1 // pred_check_branch
      %22 = sbr.rel (0) target = $region17
    $region16: #{tpu_custom_call.1} parent=1 // pred_region
      %s24 = ssub.s32 1024, 1024
      %25 = vsyncadd [#allocation4], %s24
      %s26 = sshll.u32 [#allocation3], 4
      %s27 = int_to_ptr.vmem [resolvable:$true] %s26
      %32 = dma.hbm_to_vmem [thread:$0]  %s3, 1024, %s27, [#allocation4], 64, 64, 4
    $region17: #{tpu_custom_call.1} parent=1 // pred_fallthru
      _
    // Predicated region
    $region18: #{tpu_custom_call.1} parent=1 // pred_check
      _
    $region19: #{tpu_custom_call.1} parent=1 // pred_check_branch
      %34 = sbr.rel (0) target = $region21
    $region20: #{tpu_custom_call.1} parent=1 // pred_region
      _
    $region21: #{tpu_custom_call.1} parent=1 // pred_fallthru
      _
    // Predicated region
    $region22: #{tpu_custom_call.1} parent=1 // pred_check
      _
    $region23: #{tpu_custom_call.1} parent=1 // pred_check_branch
      %36 = sbr.rel (0) target = $region25
    $region24: #{tpu_custom_call.1} parent=1 // pred_region
      _
    $region25: #{tpu_custom_call.1} parent=1 // pred_fallthru
      _
    // Predicated region
    $region26: #{tpu_custom_call.1} parent=1 // pred_check
      _
    $region27: #{tpu_custom_call.1} parent=1 // pred_check_branch
      %38 = sbr.rel (0) target = $region29
    $region28: #{tpu_custom_call.1} parent=1 // pred_region
      _
    $region29: #{tpu_custom_call.1} parent=1 // pred_fallthru
      _
    // Predicated region
    $region30: #{tpu_custom_call.1} parent=1 // pred_check
      _
    $region31: #{tpu_custom_call.1} parent=1 // pred_check_branch
      %40 = sbr.rel (0) target = $region33
    $region32: #{tpu_custom_call.1} parent=1 // pred_region
      %41 = dma.done [#allocation4], 1024
    $region33: #{tpu_custom_call.1} parent=1 // pred_fallthru
      _
    %v43 = vld [vmem:[%s0] sm:$0xff]
    %v44 = vld [vmem:[%s0 + $0x8] sm:$0xff]
    %v45 = vld [vmem:[%s0 + $0x10] sm:$0xff]
    %v46 = vld [vmem:[%s0 + $0x18] sm:$0xff]
    %v47 = vld [vmem:[%s0 + $0x20] sm:$0xff]
    %v48 = vld [vmem:[%s0 + $0x28] sm:$0xff]
    %v49 = vld [vmem:[%s0 + $0x30] sm:$0xff]
    %v50 = vld [vmem:[%s0 + $0x38] sm:$0xff]
    %v51 = vld [vmem:[%s0 + $0x40] sm:$0xff]
    %v52 = vld [vmem:[%s0 + $0x48] sm:$0xff]
    %v53 = vld [vmem:[%s0 + $0x50] sm:$0xff]
    %v54 = vld [vmem:[%s0 + $0x58] sm:$0xff]
    %v55 = vld [vmem:[%s0 + $0x60] sm:$0xff]
    %v56 = vld [vmem:[%s0 + $0x68] sm:$0xff]
    %v57 = vld [vmem:[%s0 + $0x70] sm:$0xff]
    %v58 = vld [vmem:[%s0 + $0x78] sm:$0xff]
    %v59 = vld [vmem:[%s0 + $0x80] sm:$0xff]
    %v60 = vld [vmem:[%s0 + $0x88] sm:$0xff]
    %v61 = vld [vmem:[%s0 + $0x90] sm:$0xff]
    %v62 = vld [vmem:[%s0 + $0x98] sm:$0xff]
    %v63 = vld [vmem:[%s0 + $0xa0] sm:$0xff]
    %v64 = vld [vmem:[%s0 + $0xa8] sm:$0xff]
    %v65 = vld [vmem:[%s0 + $0xb0] sm:$0xff]
    %v66 = vld [vmem:[%s0 + $0xb8] sm:$0xff]
    %v67 = vld [vmem:[%s0 + $0xc0] sm:$0xff]
    %v68 = vld [vmem:[%s0 + $0xc8] sm:$0xff]
    %v69 = vld [vmem:[%s0 + $0xd0] sm:$0xff]
    %v70 = vld [vmem:[%s0 + $0xd8] sm:$0xff]
    %v71 = vld [vmem:[%s0 + $0xe0] sm:$0xff]
    %v72 = vld [vmem:[%s0 + $0xe8] sm:$0xff]
    %v73 = vld [vmem:[%s0 + $0xf0] sm:$0xff]
    %v74 = vld [vmem:[%s0 + $0xf8] sm:$0xff]
    %v75 = vld [vmem:[%s1] sm:$0xff]
    %v76 = vld [vmem:[%s1 + $0x8] sm:$0xff]
    %v77 = vld [vmem:[%s1 + $0x10] sm:$0xff]
    %v78 = vld [vmem:[%s1 + $0x18] sm:$0xff]
    %v79 = vld [vmem:[%s1 + $0x20] sm:$0xff]
    %v80 = vld [vmem:[%s1 + $0x28] sm:$0xff]
    %v81 = vld [vmem:[%s1 + $0x30] sm:$0xff]
    %v82 = vld [vmem:[%s1 + $0x38] sm:$0xff]
    %v83 = vld [vmem:[%s1 + $0x40] sm:$0xff]
    %v84 = vld [vmem:[%s1 + $0x48] sm:$0xff]
    %v85 = vld [vmem:[%s1 + $0x50] sm:$0xff]
    %v86 = vld [vmem:[%s1 + $0x58] sm:$0xff]
    %v87 = vld [vmem:[%s1 + $0x60] sm:$0xff]
    %v88 = vld [vmem:[%s1 + $0x68] sm:$0xff]
    %v89 = vld [vmem:[%s1 + $0x70] sm:$0xff]
    %v90 = vld [vmem:[%s1 + $0x78] sm:$0xff]
    %v91 = vld [vmem:[%s2] sm:$0xff]
    %v92 = vld [vmem:[%s2 + $0x8] sm:$0xff]
    %v93 = vld [vmem:[%s2 + $0x10] sm:$0xff]
    %v94 = vld [vmem:[%s2 + $0x18] sm:$0xff]
    %v95 = vld [vmem:[%s2 + $0x20] sm:$0xff]
    %v96 = vld [vmem:[%s2 + $0x28] sm:$0xff]
    %v97 = vld [vmem:[%s2 + $0x30] sm:$0xff]
    %v98 = vld [vmem:[%s2 + $0x38] sm:$0xff]
    %v99 = vld [vmem:[%s2 + $0x40] sm:$0xff]
    %v100 = vld [vmem:[%s2 + $0x48] sm:$0xff]
    %v101 = vld [vmem:[%s2 + $0x50] sm:$0xff]
    %v102 = vld [vmem:[%s2 + $0x58] sm:$0xff]
    %v103 = vld [vmem:[%s2 + $0x60] sm:$0xff]
    %v104 = vld [vmem:[%s2 + $0x68] sm:$0xff]
    %v105 = vld [vmem:[%s2 + $0x70] sm:$0xff]
    %v106 = vld [vmem:[%s2 + $0x78] sm:$0xff]
    %108 = vset.pattern.permute.xlu0 0
    %109 = vperm.xlu0 %108, %v91
    %v110 = vpop.permute.xlu0 %109
    %113 = vset.pattern.permute.xlu0 0
    %114 = vperm.xlu0 %113, %v92
    %v115 = vpop.permute.xlu0 %114
    %118 = vset.pattern.permute.xlu0 0
    %119 = vperm.xlu0 %118, %v93
    %v120 = vpop.permute.xlu0 %119
    %123 = vset.pattern.permute.xlu0 0
    %124 = vperm.xlu0 %123, %v94
    %v125 = vpop.permute.xlu0 %124
    %128 = vset.pattern.permute.xlu0 0
    %129 = vperm.xlu0 %128, %v95
    %v130 = vpop.permute.xlu0 %129
    %133 = vset.pattern.permute.xlu0 0
    %134 = vperm.xlu0 %133, %v96
    %v135 = vpop.permute.xlu0 %134
    %138 = vset.pattern.permute.xlu0 0
    %139 = vperm.xlu0 %138, %v97
    %v140 = vpop.permute.xlu0 %139
    %143 = vset.pattern.permute.xlu0 0
    %144 = vperm.xlu0 %143, %v98
    %v145 = vpop.permute.xlu0 %144
    %148 = vset.pattern.permute.xlu0 0
    %149 = vperm.xlu0 %148, %v99
    %v150 = vpop.permute.xlu0 %149
    %153 = vset.pattern.permute.xlu0 0
    %154 = vperm.xlu0 %153, %v100
    %v155 = vpop.permute.xlu0 %154
    %158 = vset.pattern.permute.xlu0 0
    %159 = vperm.xlu0 %158, %v101
    %v160 = vpop.permute.xlu0 %159
    %163 = vset.pattern.permute.xlu0 0
    %164 = vperm.xlu0 %163, %v102
    %v165 = vpop.permute.xlu0 %164
    %168 = vset.pattern.permute.xlu0 0
    %169 = vperm.xlu0 %168, %v103
    %v170 = vpop.permute.xlu0 %169
    %173 = vset.pattern.permute.xlu0 0
    %174 = vperm.xlu0 %173, %v104
    %v175 = vpop.permute.xlu0 %174
    %178 = vset.pattern.permute.xlu0 0
    %179 = vperm.xlu0 %178, %v105
    %v180 = vpop.permute.xlu0 %179
    %183 = vset.pattern.permute.xlu0 0
    %184 = vperm.xlu0 %183, %v106
    %v185 = vpop.permute.xlu0 %184
    %v203 = vunpack.c.l.b16 %v75
    %v204 = vunpack.c.h.b16 %v75
    %v205 = vunpack.c.l.b16 %v76
    %v206 = vunpack.c.h.b16 %v76
    %v207 = vunpack.c.l.b16 %v77
    %v208 = vunpack.c.h.b16 %v77
    %v209 = vunpack.c.l.b16 %v78
    %v210 = vunpack.c.h.b16 %v78
    %v211 = vunpack.c.l.b16 %v79
    %v212 = vunpack.c.h.b16 %v79
    %v213 = vunpack.c.l.b16 %v80
    %v214 = vunpack.c.h.b16 %v80
    %v215 = vunpack.c.l.b16 %v81
    %v216 = vunpack.c.h.b16 %v81
    %v217 = vunpack.c.l.b16 %v82
    %v218 = vunpack.c.h.b16 %v82
    %v219 = vunpack.c.l.b16 %v83
    %v220 = vunpack.c.h.b16 %v83
    %v221 = vunpack.c.l.b16 %v84
    %v222 = vunpack.c.h.b16 %v84
    %v223 = vunpack.c.l.b16 %v85
    %v224 = vunpack.c.h.b16 %v85
    %v225 = vunpack.c.l.b16 %v86
    %v226 = vunpack.c.h.b16 %v86
    %v227 = vunpack.c.l.b16 %v87
    %v228 = vunpack.c.h.b16 %v87
    %v229 = vunpack.c.l.b16 %v88
    %v230 = vunpack.c.h.b16 %v88
    %v231 = vunpack.c.l.b16 %v89
    %v232 = vunpack.c.h.b16 %v89
    %v233 = vunpack.c.l.b16 %v90
    %v234 = vunpack.c.h.b16 %v90
    %v235 = vpack.c.b16 %v205, %v203
    %v236 = vpack.c.b16 %v206, %v204
    %v237 = vpack.c.b16 %v209, %v207
    %v238 = vpack.c.b16 %v210, %v208
    %v239 = vpack.c.b16 %v213, %v211
    %v240 = vpack.c.b16 %v214, %v212
    %v241 = vpack.c.b16 %v217, %v215
    %v242 = vpack.c.b16 %v218, %v216
    %v243 = vpack.c.b16 %v221, %v219
    %v244 = vpack.c.b16 %v222, %v220
    %v245 = vpack.c.b16 %v225, %v223
    %v246 = vpack.c.b16 %v226, %v224
    %v247 = vpack.c.b16 %v229, %v227
    %v248 = vpack.c.b16 %v230, %v228
    %v249 = vpack.c.b16 %v233, %v231
    %v250 = vpack.c.b16 %v234, %v232
    %v299 = vunpack.c.l.b16 %v43
    %v300 = vunpack.c.h.b16 %v43
    %v301 = vunpack.c.l.b16 %v44
    %v302 = vunpack.c.h.b16 %v44
    %v303 = vunpack.c.l.b16 %v45
    %v304 = vunpack.c.h.b16 %v45
    %v305 = vunpack.c.l.b16 %v46
    %v306 = vunpack.c.h.b16 %v46
    %v307 = vunpack.c.l.b16 %v47
    %v308 = vunpack.c.h.b16 %v47
    %v309 = vunpack.c.l.b16 %v48
    %v310 = vunpack.c.h.b16 %v48
    %v311 = vunpack.c.l.b16 %v49
    %v312 = vunpack.c.h.b16 %v49
    %v313 = vunpack.c.l.b16 %v50
    %v314 = vunpack.c.h.b16 %v50
    %v315 = vunpack.c.l.b16 %v51
    %v316 = vunpack.c.h.b16 %v51
    %v317 = vunpack.c.l.b16 %v52
    %v318 = vunpack.c.h.b16 %v52
    %v319 = vunpack.c.l.b16 %v53
    %v320 = vunpack.c.h.b16 %v53
    %v321 = vunpack.c.l.b16 %v54
    %v322 = vunpack.c.h.b16 %v54
    %v323 = vunpack.c.l.b16 %v55
    %v324 = vunpack.c.h.b16 %v55
    %v325 = vunpack.c.l.b16 %v56
    %v326 = vunpack.c.h.b16 %v56
    %v327 = vunpack.c.l.b16 %v57
    %v328 = vunpack.c.h.b16 %v57
    %v329 = vunpack.c.l.b16 %v58
    %v330 = vunpack.c.h.b16 %v58
    %v331 = vunpack.c.l.b16 %v59
    %v332 = vunpack.c.h.b16 %v59
    %v333 = vunpack.c.l.b16 %v60
    %v334 = vunpack.c.h.b16 %v60
    %v335 = vunpack.c.l.b16 %v61
    %v336 = vunpack.c.h.b16 %v61
    %v337 = vunpack.c.l.b16 %v62
    %v338 = vunpack.c.h.b16 %v62
    %v339 = vunpack.c.l.b16 %v63
    %v340 = vunpack.c.h.b16 %v63
    %v341 = vunpack.c.l.b16 %v64
    %v342 = vunpack.c.h.b16 %v64
    %v343 = vunpack.c.l.b16 %v65
    %v344 = vunpack.c.h.b16 %v65
    %v345 = vunpack.c.l.b16 %v66
    %v346 = vunpack.c.h.b16 %v66
    %v347 = vunpack.c.l.b16 %v67
    %v348 = vunpack.c.h.b16 %v67
    %v349 = vunpack.c.l.b16 %v68
    %v350 = vunpack.c.h.b16 %v68
    %v351 = vunpack.c.l.b16 %v69
    %v352 = vunpack.c.h.b16 %v69
    %v353 = vunpack.c.l.b16 %v70
    %v354 = vunpack.c.h.b16 %v70
    %v355 = vunpack.c.l.b16 %v71
    %v356 = vunpack.c.h.b16 %v71
    %v357 = vunpack.c.l.b16 %v72
    %v358 = vunpack.c.h.b16 %v72
    %v359 = vunpack.c.l.b16 %v73
    %v360 = vunpack.c.h.b16 %v73
    %v361 = vunpack.c.l.b16 %v74
    %v362 = vunpack.c.h.b16 %v74
    %v363 = vpack.c.b16 %v301, %v299
    %v364 = vpack.c.b16 %v302, %v300
    %v365 = vpack.c.b16 %v305, %v303
    %v366 = vpack.c.b16 %v306, %v304
    %v367 = vpack.c.b16 %v309, %v307
    %v368 = vpack.c.b16 %v310, %v308
    %v369 = vpack.c.b16 %v313, %v311
    %v370 = vpack.c.b16 %v314, %v312
    %v371 = vpack.c.b16 %v317, %v315
    %v372 = vpack.c.b16 %v318, %v316
    %v373 = vpack.c.b16 %v321, %v319
    %v374 = vpack.c.b16 %v322, %v320
    %v375 = vpack.c.b16 %v325, %v323
    %v376 = vpack.c.b16 %v326, %v324
    %v377 = vpack.c.b16 %v329, %v327
    %v378 = vpack.c.b16 %v330, %v328
    %v379 = vpack.c.b16 %v333, %v331
    %v380 = vpack.c.b16 %v334, %v332
    %v381 = vpack.c.b16 %v337, %v335
    %v382 = vpack.c.b16 %v338, %v336
    %v383 = vpack.c.b16 %v341, %v339
    %v384 = vpack.c.b16 %v342, %v340
    %v385 = vpack.c.b16 %v345, %v343
    %v386 = vpack.c.b16 %v346, %v344
    %v387 = vpack.c.b16 %v349, %v347
    %v388 = vpack.c.b16 %v350, %v348
    %v389 = vpack.c.b16 %v353, %v351
    %v390 = vpack.c.b16 %v354, %v352
    %v391 = vpack.c.b16 %v357, %v355
    %v392 = vpack.c.b16 %v358, %v356
    %v393 = vpack.c.b16 %v361, %v359
    %v394 = vpack.c.b16 %v362, %v360
    %427 = vmatprep.subr.bf16.mxu0 %v378
    %428 = vmatpush1.bf16.msra.mxu0 %v377
    %429 = vmatprep.subr.bf16.mxu0 %v376
    %430 = vmatpush1.bf16.msra.mxu0 %v375
    %431 = vmatprep.subr.bf16.mxu0 %v374
    %432 = vmatpush1.bf16.msra.mxu0 %v373
    %433 = vmatprep.subr.bf16.mxu0 %v372
    %434 = vmatpush1.bf16.msra.mxu0 %v371
    %435 = vmatprep.subr.bf16.mxu0 %v370
    %436 = vmatpush1.bf16.msra.mxu0 %v369
    %437 = vmatprep.subr.bf16.mxu0 %v368
    %438 = vmatpush1.bf16.msra.mxu0 %v367
    %439 = vmatprep.subr.bf16.mxu0 %v366
    %440 = vmatpush1.bf16.msra.mxu0 %v365
    %441 = vmatprep.subr.bf16.mxu0 %v364
    %442 = vmatpush1.bf16.msra.mxu0 %v363
    %443 = vmatprep.subr.bf16.mxu0 %v394
    %444 = vmatpush2.bf16.msra.mxu0 %v393
    %445 = vmatprep.subr.bf16.mxu0 %v392
    %446 = vmatpush2.bf16.msra.mxu0 %v391
    %447 = vmatprep.subr.bf16.mxu0 %v390
    %448 = vmatpush2.bf16.msra.mxu0 %v389
    %449 = vmatprep.subr.bf16.mxu0 %v388
    %450 = vmatpush2.bf16.msra.mxu0 %v387
    %451 = vmatprep.subr.bf16.mxu0 %v386
    %452 = vmatpush2.bf16.msra.mxu0 %v385
    %453 = vmatprep.subr.bf16.mxu0 %v384
    %454 = vmatpush2.bf16.msra.mxu0 %v383
    %455 = vmatprep.subr.bf16.mxu0 %v382
    %456 = vmatpush2.bf16.msra.mxu0 %v381
    %457 = vmatprep.subr.bf16.mxu0 %v380
    %458 = vmatpush2.bf16.msra.mxu0 %v379
    %459 = vmatprep.mubr.bf16.mxu0 %v236
    %460 = vmatmul.mubr.bf16.gmra.mxu0 %v235
    %v461 = vpop.f32.mrf.mxu0
    %v462 = vadd.f32 %v110, %v461
    %v463 = vpop.f32.mrf.mxu0
    %v464 = vadd.f32 %v110, %v463
    %v465 = vpop.f32.mrf.mxu0
    %v466 = vadd.f32 %v115, %v465
    %v467 = vpop.f32.mrf.mxu0
    %v468 = vadd.f32 %v115, %v467
    %469 = vmatprep.mubr.bf16.mxu0 %v238
    %470 = vmatmul.mubr.bf16.gmra.mxu0 %v237
    %v471 = vpop.f32.mrf.mxu0
    %v472 = vadd.f32 %v120, %v471
    %v473 = vpop.f32.mrf.mxu0
    %v474 = vadd.f32 %v120, %v473
    %v475 = vpop.f32.mrf.mxu0
    %v476 = vadd.f32 %v125, %v475
    %v477 = vpop.f32.mrf.mxu0
    %v478 = vadd.f32 %v125, %v477
    %479 = vmatprep.mubr.bf16.mxu0 %v240
    %480 = vmatmul.mubr.bf16.gmra.mxu0 %v239
    %v481 = vpop.f32.mrf.mxu0
    %v482 = vadd.f32 %v130, %v481
    %v483 = vpop.f32.mrf.mxu0
    %v484 = vadd.f32 %v130, %v483
    %v485 = vpop.f32.mrf.mxu0
    %v486 = vadd.f32 %v135, %v485
    %v487 = vpop.f32.mrf.mxu0
    %v488 = vadd.f32 %v135, %v487
    %489 = vmatprep.mubr.bf16.mxu0 %v242
    %490 = vmatmul.mubr.bf16.gmra.mxu0 %v241
    %v491 = vpop.f32.mrf.mxu0
    %v492 = vadd.f32 %v140, %v491
    %v493 = vpop.f32.mrf.mxu0
    %v494 = vadd.f32 %v140, %v493
    %v495 = vpop.f32.mrf.mxu0
    %v496 = vadd.f32 %v145, %v495
    %v497 = vpop.f32.mrf.mxu0
    %v498 = vadd.f32 %v145, %v497
    %499 = vmatprep.mubr.bf16.mxu0 %v244
    %500 = vmatmul.mubr.bf16.gmra.mxu0 %v243
    %v501 = vpop.f32.mrf.mxu0
    %v502 = vadd.f32 %v150, %v501
    %v503 = vpop.f32.mrf.mxu0
    %v504 = vadd.f32 %v150, %v503
    %v505 = vpop.f32.mrf.mxu0
    %v506 = vadd.f32 %v155, %v505
    %v507 = vpop.f32.mrf.mxu0
    %v508 = vadd.f32 %v155, %v507
    %509 = vmatprep.mubr.bf16.mxu0 %v246
    %510 = vmatmul.mubr.bf16.gmra.mxu0 %v245
    %v511 = vpop.f32.mrf.mxu0
    %v512 = vadd.f32 %v160, %v511
    %v513 = vpop.f32.mrf.mxu0
    %v514 = vadd.f32 %v160, %v513
    %v515 = vpop.f32.mrf.mxu0
    %v516 = vadd.f32 %v165, %v515
    %v517 = vpop.f32.mrf.mxu0
    %v518 = vadd.f32 %v165, %v517
    %519 = vmatprep.mubr.bf16.mxu0 %v248
    %520 = vmatmul.mubr.bf16.gmra.mxu0 %v247
    %v521 = vpop.f32.mrf.mxu0
    %v522 = vadd.f32 %v170, %v521
    %v523 = vpop.f32.mrf.mxu0
    %v524 = vadd.f32 %v170, %v523
    %v525 = vpop.f32.mrf.mxu0
    %v526 = vadd.f32 %v175, %v525
    %v527 = vpop.f32.mrf.mxu0
    %v528 = vadd.f32 %v175, %v527
    %529 = vmatprep.mubr.bf16.mxu0 %v250
    %530 = vmatmul.mubr.bf16.gmra.mxu0 %v249
    %v531 = vpop.f32.mrf.mxu0
    %v532 = vadd.f32 %v180, %v531
    %v533 = vpop.f32.mrf.mxu0
    %v534 = vadd.f32 %v180, %v533
    %v535 = vpop.f32.mrf.mxu0
    %v536 = vadd.f32 %v185, %v535
    %v537 = vpop.f32.mrf.mxu0
    %v538 = vadd.f32 %v185, %v537
    %539 = vdwg.mxu0
    %v540 = vmax.f32 %v462, 0.0
    %v541 = vmax.f32 %v464, 0.0
    %v542 = vmax.f32 %v466, 0.0
    %v543 = vmax.f32 %v468, 0.0
    %v544 = vmax.f32 %v472, 0.0
    %v545 = vmax.f32 %v474, 0.0
    %v546 = vmax.f32 %v476, 0.0
    %v547 = vmax.f32 %v478, 0.0
    %v548 = vmax.f32 %v482, 0.0
    %v549 = vmax.f32 %v484, 0.0
    %v550 = vmax.f32 %v486, 0.0
    %v551 = vmax.f32 %v488, 0.0
    %v552 = vmax.f32 %v492, 0.0
    %v553 = vmax.f32 %v494, 0.0
    %v554 = vmax.f32 %v496, 0.0
    %v555 = vmax.f32 %v498, 0.0
    %v556 = vmax.f32 %v502, 0.0
    %v557 = vmax.f32 %v504, 0.0
    %v558 = vmax.f32 %v506, 0.0
    %v559 = vmax.f32 %v508, 0.0
    %v560 = vmax.f32 %v512, 0.0
    %v561 = vmax.f32 %v514, 0.0
    %v562 = vmax.f32 %v516, 0.0
    %v563 = vmax.f32 %v518, 0.0
    %v564 = vmax.f32 %v522, 0.0
    %v565 = vmax.f32 %v524, 0.0
    %v566 = vmax.f32 %v526, 0.0
    %v567 = vmax.f32 %v528, 0.0
    %v568 = vmax.f32 %v532, 0.0
    %v569 = vmax.f32 %v534, 0.0
    %v570 = vmax.f32 %v536, 0.0
    %v571 = vmax.f32 %v538, 0.0
    %v572 = vpack.c.bf16 %v542, %v540
    %v573 = vpack.c.bf16 %v543, %v541
    %v574 = vpack.c.bf16 %v546, %v544
    %v575 = vpack.c.bf16 %v547, %v545
    %v576 = vpack.c.bf16 %v550, %v548
    %v577 = vpack.c.bf16 %v551, %v549
    %v578 = vpack.c.bf16 %v554, %v552
    %v579 = vpack.c.bf16 %v555, %v553
    %v580 = vpack.c.bf16 %v558, %v556
    %v581 = vpack.c.bf16 %v559, %v557
    %v582 = vpack.c.bf16 %v562, %v560
    %v583 = vpack.c.bf16 %v563, %v561
    %v584 = vpack.c.bf16 %v566, %v564
    %v585 = vpack.c.bf16 %v567, %v565
    %v586 = vpack.c.bf16 %v570, %v568
    %v587 = vpack.c.bf16 %v571, %v569
    %v588 = vld [vmem:[#allocation3] sm:$0xf]
    %v589 = vld [vmem:[#allocation3 + $0x4] sm:$0xf]
    %v590 = vld [vmem:[#allocation3 + $0x8] sm:$0xf]
    %v591 = vld [vmem:[#allocation3 + $0xc] sm:$0xf]
    %v592 = vld [vmem:[#allocation3 + $0x10] sm:$0xf]
    %v593 = vld [vmem:[#allocation3 + $0x14] sm:$0xf]
    %v594 = vld [vmem:[#allocation3 + $0x18] sm:$0xf]
    %v595 = vld [vmem:[#allocation3 + $0x1c] sm:$0xf]
    %v596 = vld [vmem:[#allocation3 + $0x20] sm:$0xf]
    %v597 = vld [vmem:[#allocation3 + $0x24] sm:$0xf]
    %v598 = vld [vmem:[#allocation3 + $0x28] sm:$0xf]
    %v599 = vld [vmem:[#allocation3 + $0x2c] sm:$0xf]
    %v600 = vld [vmem:[#allocation3 + $0x30] sm:$0xf]
    %v601 = vld [vmem:[#allocation3 + $0x34] sm:$0xf]
    %v602 = vld [vmem:[#allocation3 + $0x38] sm:$0xf]
    %v603 = vld [vmem:[#allocation3 + $0x3c] sm:$0xf]
    %v604 = vld [vmem:[%s4] sm:$0xff]
    %v605 = vld [vmem:[%s4 + $0x8] sm:$0xff]
    %v606 = vld [vmem:[%s4 + $0x10] sm:$0xff]
    %v607 = vld [vmem:[%s4 + $0x18] sm:$0xff]
    %v608 = vld [vmem:[%s4 + $0x20] sm:$0xff]
    %v609 = vld [vmem:[%s4 + $0x28] sm:$0xff]
    %v610 = vld [vmem:[%s4 + $0x30] sm:$0xff]
    %v611 = vld [vmem:[%s4 + $0x38] sm:$0xff]
    %v612 = vld [vmem:[%s4 + $0x40] sm:$0xff]
    %v613 = vld [vmem:[%s4 + $0x48] sm:$0xff]
    %v614 = vld [vmem:[%s4 + $0x50] sm:$0xff]
    %v615 = vld [vmem:[%s4 + $0x58] sm:$0xff]
    %v616 = vld [vmem:[%s4 + $0x60] sm:$0xff]
    %v617 = vld [vmem:[%s4 + $0x68] sm:$0xff]
    %v618 = vld [vmem:[%s4 + $0x70] sm:$0xff]
    %v619 = vld [vmem:[%s4 + $0x78] sm:$0xff]
    %621 = vset.pattern.permute.xlu0 0
    %622 = vperm.xlu0 %621, %v604
    %v623 = vpop.permute.xlu0 %622
    %626 = vset.pattern.permute.xlu0 0
    %627 = vperm.xlu0 %626, %v605
    %v628 = vpop.permute.xlu0 %627
    %631 = vset.pattern.permute.xlu0 0
    %632 = vperm.xlu0 %631, %v606
    %v633 = vpop.permute.xlu0 %632
    %636 = vset.pattern.permute.xlu0 0
    %637 = vperm.xlu0 %636, %v607
    %v638 = vpop.permute.xlu0 %637
    %641 = vset.pattern.permute.xlu0 0
    %642 = vperm.xlu0 %641, %v608
    %v643 = vpop.permute.xlu0 %642
    %646 = vset.pattern.permute.xlu0 0
    %647 = vperm.xlu0 %646, %v609
    %v648 = vpop.permute.xlu0 %647
    %651 = vset.pattern.permute.xlu0 0
    %652 = vperm.xlu0 %651, %v610
    %v653 = vpop.permute.xlu0 %652
    %656 = vset.pattern.permute.xlu0 0
    %657 = vperm.xlu0 %656, %v611
    %v658 = vpop.permute.xlu0 %657
    %661 = vset.pattern.permute.xlu0 0
    %662 = vperm.xlu0 %661, %v612
    %v663 = vpop.permute.xlu0 %662
    %666 = vset.pattern.permute.xlu0 0
    %667 = vperm.xlu0 %666, %v613
    %v668 = vpop.permute.xlu0 %667
    %671 = vset.pattern.permute.xlu0 0
    %672 = vperm.xlu0 %671, %v614
    %v673 = vpop.permute.xlu0 %672
    %676 = vset.pattern.permute.xlu0 0
    %677 = vperm.xlu0 %676, %v615
    %v678 = vpop.permute.xlu0 %677
    %681 = vset.pattern.permute.xlu0 0
    %682 = vperm.xlu0 %681, %v616
    %v683 = vpop.permute.xlu0 %682
    %686 = vset.pattern.permute.xlu0 0
    %687 = vperm.xlu0 %686, %v617
    %v688 = vpop.permute.xlu0 %687
    %691 = vset.pattern.permute.xlu0 0
    %692 = vperm.xlu0 %691, %v618
    %v693 = vpop.permute.xlu0 %692
    %696 = vset.pattern.permute.xlu0 0
    %697 = vperm.xlu0 %696, %v619
    %v698 = vpop.permute.xlu0 %697
    %v716 = vunpack.c.l.b16 %v588
    %v717 = vunpack.c.l.b16 %v589
    %v718 = vunpack.c.l.b16 %v590
    %v719 = vunpack.c.l.b16 %v591
    %v720 = vunpack.c.l.b16 %v592
    %v721 = vunpack.c.l.b16 %v593
    %v722 = vunpack.c.l.b16 %v594
    %v723 = vunpack.c.l.b16 %v595
    %v724 = vunpack.c.l.b16 %v596
    %v725 = vunpack.c.l.b16 %v597
    %v726 = vunpack.c.l.b16 %v598
    %v727 = vunpack.c.l.b16 %v599
    %v728 = vunpack.c.l.b16 %v600
    %v729 = vunpack.c.l.b16 %v601
    %v730 = vunpack.c.l.b16 %v602
    %v731 = vunpack.c.l.b16 %v603
    %v732 = vpack.c.b16 %v717, %v716
    %v733 = vpack.c.b16 %v719, %v718
    %v734 = vpack.c.b16 %v721, %v720
    %v735 = vpack.c.b16 %v723, %v722
    %v736 = vpack.c.b16 %v725, %v724
    %v737 = vpack.c.b16 %v727, %v726
    %v738 = vpack.c.b16 %v729, %v728
    %v739 = vpack.c.b16 %v731, %v730
    %748 = vmatprep.subr.bf16.mxu0 %v587
    %749 = vmatpush1.bf16.msra.mxu0 %v586
    %750 = vmatprep.subr.bf16.mxu0 %v585
    %751 = vmatpush1.bf16.msra.mxu0 %v584
    %752 = vmatprep.subr.bf16.mxu0 %v583
    %753 = vmatpush1.bf16.msra.mxu0 %v582
    %754 = vmatprep.subr.bf16.mxu0 %v581
    %755 = vmatpush1.bf16.msra.mxu0 %v580
    %756 = vmatprep.subr.bf16.mxu0 %v579
    %757 = vmatpush1.bf16.msra.mxu0 %v578
    %758 = vmatprep.subr.bf16.mxu0 %v577
    %759 = vmatpush1.bf16.msra.mxu0 %v576
    %760 = vmatprep.subr.bf16.mxu0 %v575
    %761 = vmatpush1.bf16.msra.mxu0 %v574
    %762 = vmatprep.subr.bf16.mxu0 %v573
    %763 = vmatpush1.bf16.msra.mxu0 %v572
    %764 = vmatprep.subr.bf16.mxu0 0
    %765 = vmatpush2.bf16.msra.mxu0 0
    %766 = vmatprep.subr.bf16.mxu0 0
    %767 = vmatpush2.bf16.msra.mxu0 0
    %768 = vmatprep.subr.bf16.mxu0 0
    %769 = vmatpush2.bf16.msra.mxu0 0
    %770 = vmatprep.subr.bf16.mxu0 0
    %771 = vmatpush2.bf16.msra.mxu0 0
    %772 = vmatprep.subr.bf16.mxu0 0
    %773 = vmatpush2.bf16.msra.mxu0 0
    %774 = vmatprep.subr.bf16.mxu0 0
    %775 = vmatpush2.bf16.msra.mxu0 0
    %776 = vmatprep.subr.bf16.mxu0 0
    %777 = vmatpush2.bf16.msra.mxu0 0
    %778 = vmatprep.subr.bf16.mxu0 0
    %779 = vmatpush2.bf16.msra.mxu0 0
    %780 = vmatprep.mubr.bf16.mxu0 0
    %781 = vmatmul.mubr.bf16.gmra.mxu0 %v732
    %v782 = vpop.f32.mrf.mxu0
    %v783 = vadd.f32 %v623, %v782
    %v784 = vpop.f32.mrf.mxu0
    %v785 = vadd.f32 %v623, %v784
    %v786 = vpop.f32.mrf.mxu0
    %v787 = vadd.f32 %v628, %v786
    %v788 = vpop.f32.mrf.mxu0
    %v789 = vadd.f32 %v628, %v788
    %790 = vmatprep.mubr.bf16.mxu0 0
    %791 = vmatmul.mubr.bf16.gmra.mxu0 %v733
    %v792 = vpop.f32.mrf.mxu0
    %v793 = vadd.f32 %v633, %v792
    %v794 = vpop.f32.mrf.mxu0
    %v795 = vadd.f32 %v633, %v794
    %v796 = vpop.f32.mrf.mxu0
    %v797 = vadd.f32 %v638, %v796
    %v798 = vpop.f32.mrf.mxu0
    %v799 = vadd.f32 %v638, %v798
    %800 = vmatprep.mubr.bf16.mxu0 0
    %801 = vmatmul.mubr.bf16.gmra.mxu0 %v734
    %v802 = vpop.f32.mrf.mxu0
    %v803 = vadd.f32 %v643, %v802
    %v804 = vpop.f32.mrf.mxu0
    %v805 = vadd.f32 %v643, %v804
    %v806 = vpop.f32.mrf.mxu0
    %v807 = vadd.f32 %v648, %v806
    %v808 = vpop.f32.mrf.mxu0
    %v809 = vadd.f32 %v648, %v808
    %810 = vmatprep.mubr.bf16.mxu0 0
    %811 = vmatmul.mubr.bf16.gmra.mxu0 %v735
    %v812 = vpop.f32.mrf.mxu0
    %v813 = vadd.f32 %v653, %v812
    %v814 = vpop.f32.mrf.mxu0
    %v815 = vadd.f32 %v653, %v814
    %v816 = vpop.f32.mrf.mxu0
    %v817 = vadd.f32 %v658, %v816
    %v818 = vpop.f32.mrf.mxu0
    %v819 = vadd.f32 %v658, %v818
    %820 = vmatprep.mubr.bf16.mxu0 0
    %821 = vmatmul.mubr.bf16.gmra.mxu0 %v736
    %v822 = vpop.f32.mrf.mxu0
    %v823 = vadd.f32 %v663, %v822
    %v824 = vpop.f32.mrf.mxu0
    %v825 = vadd.f32 %v663, %v824
    %v826 = vpop.f32.mrf.mxu0
    %v827 = vadd.f32 %v668, %v826
    %v828 = vpop.f32.mrf.mxu0
    %v829 = vadd.f32 %v668, %v828
    %830 = vmatprep.mubr.bf16.mxu0 0
    %831 = vmatmul.mubr.bf16.gmra.mxu0 %v737
    %v832 = vpop.f32.mrf.mxu0
    %v833 = vadd.f32 %v673, %v832
    %v834 = vpop.f32.mrf.mxu0
    %v835 = vadd.f32 %v673, %v834
    %v836 = vpop.f32.mrf.mxu0
    %v837 = vadd.f32 %v678, %v836
    %v838 = vpop.f32.mrf.mxu0
    %v839 = vadd.f32 %v678, %v838
    %840 = vmatprep.mubr.bf16.mxu0 0
    %841 = vmatmul.mubr.bf16.gmra.mxu0 %v738
    %v842 = vpop.f32.mrf.mxu0
    %v843 = vadd.f32 %v683, %v842
    %v844 = vpop.f32.mrf.mxu0
    %v845 = vadd.f32 %v683, %v844
    %v846 = vpop.f32.mrf.mxu0
    %v847 = vadd.f32 %v688, %v846
    %v848 = vpop.f32.mrf.mxu0
    %v849 = vadd.f32 %v688, %v848
    %850 = vmatprep.mubr.bf16.mxu0 0
    %851 = vmatmul.mubr.bf16.gmra.mxu0 %v739
    %v852 = vpop.f32.mrf.mxu0
    %v853 = vadd.f32 %v693, %v852
    %v854 = vpop.f32.mrf.mxu0
    %v855 = vadd.f32 %v693, %v854
    %v856 = vpop.f32.mrf.mxu0
    %v857 = vadd.f32 %v698, %v856
    %v858 = vpop.f32.mrf.mxu0
    %v859 = vadd.f32 %v698, %v858
    %860 = vdwg.mxu0
    %v861 = vmax.f32 %v783, 0.0
    %v862 = vmax.f32 %v785, 0.0
    %v863 = vmax.f32 %v787, 0.0
    %v864 = vmax.f32 %v789, 0.0
    %v865 = vmax.f32 %v793, 0.0
    %v866 = vmax.f32 %v795, 0.0
    %v867 = vmax.f32 %v797, 0.0
    %v868 = vmax.f32 %v799, 0.0
    %v869 = vmax.f32 %v803, 0.0
    %v870 = vmax.f32 %v805, 0.0
    %v871 = vmax.f32 %v807, 0.0
    %v872 = vmax.f32 %v809, 0.0
    %v873 = vmax.f32 %v813, 0.0
    %v874 = vmax.f32 %v815, 0.0
    %v875 = vmax.f32 %v817, 0.0
    %v876 = vmax.f32 %v819, 0.0
    %v877 = vmax.f32 %v823, 0.0
    %v878 = vmax.f32 %v825, 0.0
    %v879 = vmax.f32 %v827, 0.0
    %v880 = vmax.f32 %v829, 0.0
    %v881 = vmax.f32 %v833, 0.0
    %v882 = vmax.f32 %v835, 0.0
    %v883 = vmax.f32 %v837, 0.0
    %v884 = vmax.f32 %v839, 0.0
    %v885 = vmax.f32 %v843, 0.0
    %v886 = vmax.f32 %v845, 0.0
    %v887 = vmax.f32 %v847, 0.0
    %v888 = vmax.f32 %v849, 0.0
    %v889 = vmax.f32 %v853, 0.0
    %v890 = vmax.f32 %v855, 0.0
    %v891 = vmax.f32 %v857, 0.0
    %v892 = vmax.f32 %v859, 0.0
    %v893 = vld [vmem:[%s5] sm:$0xff]
    %v894 = vld [vmem:[%s5 + $0x8] sm:$0xff]
    %v895 = vld [vmem:[%s5 + $0x10] sm:$0xff]
    %v896 = vld [vmem:[%s5 + $0x18] sm:$0xff]
    %v897 = vld [vmem:[%s5 + $0x20] sm:$0xff]
    %v898 = vld [vmem:[%s5 + $0x28] sm:$0xff]
    %v899 = vld [vmem:[%s5 + $0x30] sm:$0xff]
    %v900 = vld [vmem:[%s5 + $0x38] sm:$0xff]
    %v901 = vld [vmem:[%s5 + $0x40] sm:$0xff]
    %v902 = vld [vmem:[%s5 + $0x48] sm:$0xff]
    %v903 = vld [vmem:[%s5 + $0x50] sm:$0xff]
    %v904 = vld [vmem:[%s5 + $0x58] sm:$0xff]
    %v905 = vld [vmem:[%s5 + $0x60] sm:$0xff]
    %v906 = vld [vmem:[%s5 + $0x68] sm:$0xff]
    %v907 = vld [vmem:[%s5 + $0x70] sm:$0xff]
    %v908 = vld [vmem:[%s5 + $0x78] sm:$0xff]
    %910 = vset.pattern.permute.xlu0 0
    %911 = vperm.xlu0 %910, %v893
    %v912 = vpop.permute.xlu0 %911
    %915 = vset.pattern.permute.xlu0 0
    %916 = vperm.xlu0 %915, %v894
    %v917 = vpop.permute.xlu0 %916
    %920 = vset.pattern.permute.xlu0 0
    %921 = vperm.xlu0 %920, %v895
    %v922 = vpop.permute.xlu0 %921
    %925 = vset.pattern.permute.xlu0 0
    %926 = vperm.xlu0 %925, %v896
    %v927 = vpop.permute.xlu0 %926
    %930 = vset.pattern.permute.xlu0 0
    %931 = vperm.xlu0 %930, %v897
    %v932 = vpop.permute.xlu0 %931
    %935 = vset.pattern.permute.xlu0 0
    %936 = vperm.xlu0 %935, %v898
    %v937 = vpop.permute.xlu0 %936
    %940 = vset.pattern.permute.xlu0 0
    %941 = vperm.xlu0 %940, %v899
    %v942 = vpop.permute.xlu0 %941
    %945 = vset.pattern.permute.xlu0 0
    %946 = vperm.xlu0 %945, %v900
    %v947 = vpop.permute.xlu0 %946
    %950 = vset.pattern.permute.xlu0 0
    %951 = vperm.xlu0 %950, %v901
    %v952 = vpop.permute.xlu0 %951
    %955 = vset.pattern.permute.xlu0 0
    %956 = vperm.xlu0 %955, %v902
    %v957 = vpop.permute.xlu0 %956
    %960 = vset.pattern.permute.xlu0 0
    %961 = vperm.xlu0 %960, %v903
    %v962 = vpop.permute.xlu0 %961
    %965 = vset.pattern.permute.xlu0 0
    %966 = vperm.xlu0 %965, %v904
    %v967 = vpop.permute.xlu0 %966
    %970 = vset.pattern.permute.xlu0 0
    %971 = vperm.xlu0 %970, %v905
    %v972 = vpop.permute.xlu0 %971
    %975 = vset.pattern.permute.xlu0 0
    %976 = vperm.xlu0 %975, %v906
    %v977 = vpop.permute.xlu0 %976
    %980 = vset.pattern.permute.xlu0 0
    %981 = vperm.xlu0 %980, %v907
    %v982 = vpop.permute.xlu0 %981
    %985 = vset.pattern.permute.xlu0 0
    %986 = vperm.xlu0 %985, %v908
    %v987 = vpop.permute.xlu0 %986
    %v989 = vmul.f32 %v912, %v861
    %v990 = vmul.f32 %v912, %v862
    %v991 = vmul.f32 %v917, %v863
    %v992 = vmul.f32 %v917, %v864
    %v993 = vmul.f32 %v922, %v865
    %v994 = vmul.f32 %v922, %v866
    %v995 = vmul.f32 %v927, %v867
    %v996 = vmul.f32 %v927, %v868
    %v997 = vmul.f32 %v932, %v869
    %v998 = vmul.f32 %v932, %v870
    %v999 = vmul.f32 %v937, %v871
    %v1000 = vmul.f32 %v937, %v872
    %v1001 = vmul.f32 %v942, %v873
    %v1002 = vmul.f32 %v942, %v874
    %v1003 = vmul.f32 %v947, %v875
    %v1004 = vmul.f32 %v947, %v876
    %v1005 = vmul.f32 %v952, %v877
    %v1006 = vmul.f32 %v952, %v878
    %v1007 = vmul.f32 %v957, %v879
    %v1008 = vmul.f32 %v957, %v880
    %v1009 = vmul.f32 %v962, %v881
    %v1010 = vmul.f32 %v962, %v882
    %v1011 = vmul.f32 %v967, %v883
    %v1012 = vmul.f32 %v967, %v884
    %v1013 = vmul.f32 %v972, %v885
    %v1014 = vmul.f32 %v972, %v886
    %v1015 = vmul.f32 %v977, %v887
    %v1016 = vmul.f32 %v977, %v888
    %v1017 = vmul.f32 %v982, %v889
    %v1018 = vmul.f32 %v982, %v890
    %v1019 = vmul.f32 %v987, %v891
    %v1020 = vmul.f32 %v987, %v892
    %v1021 = vadd.f32 %v989, %v991
    %v1022 = vadd.f32 %v1021, %v993
    %v1023 = vadd.f32 %v1022, %v995
    %v1024 = vadd.f32 %v1023, %v997
    %v1025 = vadd.f32 %v1024, %v999
    %v1026 = vadd.f32 %v1025, %v1001
    %v1027 = vadd.f32 %v1026, %v1003
    %v1028 = vadd.f32 %v1027, %v1005
    %v1029 = vadd.f32 %v1028, %v1007
    %v1030 = vadd.f32 %v1029, %v1009
    %v1031 = vadd.f32 %v1030, %v1011
    %v1032 = vadd.f32 %v1031, %v1013
    %v1033 = vadd.f32 %v1032, %v1015
    %v1034 = vadd.f32 %v1033, %v1017
    %v1035 = vadd.f32 %v1034, %v1019
    %v1036 = vrot.slane %v1035, 4
    %v1037 = vadd.f32 %v1035, %v1036
    %v1038 = vrot.slane %v1037, 2
    %v1039 = vadd.f32 %v1037, %v1038
    %v1040 = vrot.slane %v1039, 1
    %v1041 = vadd.f32 %v1039, %v1040
    %v1042 = vadd.f32 %v990, %v992
    %v1043 = vadd.f32 %v1042, %v994
    %v1044 = vadd.f32 %v1043, %v996
    %v1045 = vadd.f32 %v1044, %v998
    %v1046 = vadd.f32 %v1045, %v1000
    %v1047 = vadd.f32 %v1046, %v1002
    %v1048 = vadd.f32 %v1047, %v1004
    %v1049 = vadd.f32 %v1048, %v1006
    %v1050 = vadd.f32 %v1049, %v1008
    %v1051 = vadd.f32 %v1050, %v1010
    %v1052 = vadd.f32 %v1051, %v1012
    %v1053 = vadd.f32 %v1052, %v1014
    %v1054 = vadd.f32 %v1053, %v1016
    %v1055 = vadd.f32 %v1054, %v1018
    %v1056 = vadd.f32 %v1055, %v1020
    %v1057 = vrot.slane %v1056, 4
    %v1058 = vadd.f32 %v1056, %v1057
    %v1059 = vrot.slane %v1058, 2
    %v1060 = vadd.f32 %v1058, %v1059
    %v1061 = vrot.slane %v1060, 1
    %v1062 = vadd.f32 %v1060, %v1061
    %s1063 = sld [smem:[#allocation2]]
    %v1064 = vstv %s1063
    %v1065 = vadd.f32 %v1041, %v1064
    %v1066 = vadd.f32 %v1062, %v1064
    %v1069 = vcombine.low %v1065, %v1066
    %v1071 = vunpack.c.l.s4 1966171168
    %v1072 = vunpack.c.0.s8 %v1071
    %v1073 = vlaneseq
    %v1074 = vshrl.u32 %v1073, 7
    %v1075 = vsub.s32 %v1072, %v1074
    %v1076 = vrot.slane %v1069, %v1075
    %v1078 = vunpack.c.l.s4 1966171168
    %v1079 = vunpack.c.0.s8 %v1078
    %v1080 = vlaneseq
    %v1081 = vshrl.u32 %v1080, 7
    %v1082 = vsub.s32 %v1079, %v1081
    %v1083 = vrot.slane %v1076, %v1082
    %v1085 = vlaneseq
    %vm1086 = vcmp.ge.s32.totalorder %v1085, 0
    %vm1087 = vcmp.lt.s32.totalorder %v1085, 256
    %vm1088 = vmand %vm1086, %vm1087
    %1089 = vst.msk [vmem:[#allocation6] sm:$0x3] %vm1088, %v1083
    // Predicated region
    $region34: #{tpu_custom_call.1} parent=1 // pred_check
      _
    $region35: #{tpu_custom_call.1} parent=1 // pred_check_branch
      %1091 = sbr.rel (0) target = $region37
    $region36: #{tpu_custom_call.1} parent=1 // pred_region
      %s1093 = ssub.s32 32, 32
      %1094 = vsyncadd [#allocation5], %s1093
      %s1096 = sshll.u32 [#allocation6], 4
      %s1097 = int_to_ptr.vmem [resolvable:$true] %s1096
      %1099 = dma.vmem_to_hbm [thread:$0]  %s1097, 32, %s7, [#allocation5]
    $region37: #{tpu_custom_call.1} parent=1 // pred_fallthru
      _
    // Predicated region
    $region38: #{tpu_custom_call.1} parent=1 // pred_check
      _
    $region39: #{tpu_custom_call.1} parent=1 // pred_check_branch
      %1101 = sbr.rel (0) target = $region41
    $region40: #{tpu_custom_call.1} parent=1 // pred_region
      %1102 = dma.done [#allocation5], 32
    $region41: #{tpu_custom_call.1} parent=1 // pred_fallthru
      _
    %1103 = vsyncpa [#allocation4], 1
    %1104 = vsyncpa [#allocation5], 1

</llo_original>
